<compile_context>
chip_gen: v7x
topology: tpu7x:2x2x1
jax: 0.10.0
libtpu: 0.0.40
codegen_flags: <defaults>
</compile_context>

<pallas_src>
import jax
import jax.numpy as jnp
from jax.experimental import pallas as pl
from jax.experimental.pallas import tpu as pltpu


# ------------------------------ constants ---------------------------------- #
_SCALE_GEMM_MAX_D = 128        # route VW/VW+B/SW through the GEMM when the
                               # class count is small (lane-dense output)
_TM_CAP = 1024                 # max batch rows per block
_TN_CAP = 2048                 # max output lanes per block
_TILE_BUDGET_FRACTION = 0.6    # headroom inside the scoped-VMEM limit


def _cdiv(a, b):
    return -(-a // b)


def _round_up(x, m):
    return ((x + m - 1) // m) * m


def _round_down(x, m):
    return (x // m) * m


def _sublane_align(itemsize):
    # f32 -> 8, bf16 -> 16, int8/fp8 -> 32 rows per sublane tile
    return max(8, 32 // max(int(itemsize), 1))


def _vmem_limit_bytes():
    """Scoped-VMEM limit: ~half the physical capacity, so the same tiles are
    safe on v7x (64 MiB/TC) and comfortable on v5e/v6e (128 MiB)."""
    try:
        cap = int(pltpu.get_tpu_info().vmem_capacity_bytes)
    except Exception:
        cap = 64 * 1024 * 1024                 # conservative (v7x-sized) fallback
    return max(16 * 1024 * 1024, min(cap // 2, 64 * 1024 * 1024))


# ------------------------------- kernels ----------------------------------- #
def _gemm_kernel(x_ref, w_ref, o_ref):
    # x_ref: (tm, K)  w_ref: (K, tn)  o_ref: (tm, tn) -- one MXU pass,
    # f32 accumulation regardless of the streaming dtype.
    o_ref[...] = jnp.dot(
        x_ref[...], w_ref[...], preferred_element_type=jnp.float32
    ).astype(o_ref.dtype)


def _scale_kernel(x_ref, s_ref, o_ref):
    # x_ref: (tm, D)  s_ref: (A, D)  o_ref: (tm, A, D)
    # Dense 2-D x block; broadcast happens in-kernel (free on the VPU).
    # Math is done in f32 (v5e has no bf16 VALU).
    xv = x_ref[...].astype(jnp.float32)[:, None, :]
    sv = s_ref[...].astype(jnp.float32)[None, :, :]
    o_ref[...] = (xv * sv).astype(o_ref.dtype)


# ---------------------------- tile selection -------------------------------- #
def _gemm_tiles(B, K, N, in_item, out_item, budget, align):
    """Largest (tm, tn) whose double-buffered x/w/out blocks fit `budget`."""
    cands = [N] + [t for t in (_TN_CAP, 1024, 512, 256, 128) if t < N]
    per_buf = budget // 2          # everything is double-buffered
    for tn in cands:
        if tn != N and tn % 128 != 0:
            continue
        rem = per_buf - K * tn * in_item
        if rem <= 0:
            continue
        tm_max = rem // (K * in_item + tn * out_item)
        if tm_max >= B:
            return B, tn
        tm = _round_down(min(tm_max, _TM_CAP), align)
        if tm >= align:
            return tm, tn
    return min(B, align), min(N, 128)          # last-ditch tiny tiles


def _scale_tiles(B, A, D, in_item, out_item, budget, align):
    per_buf = budget // 2
    rem = per_buf - A * D * in_item            # scale table, fetched once
    denom = D * in_item + A * D * out_item
    tm_max = max(rem, 0) // denom
    if tm_max >= B:
        return B
    tm = _round_down(min(tm_max, _TM_CAP), align)
    return max(tm, align)


def _ensure_two_blocks(tm, B, other_axis_blocks, align):
    """v7x has 2 TensorCores: guarantee >=2 blocks along a 'parallel' axis when
    the grid would otherwise collapse to a single step (one extra ~0.35us step
    on 1-TC v5e/v6e)."""
    if other_axis_blocks == 1 and tm >= B and B >= 2 * align:
        return _round_up(_cdiv(B, 2), align)
    return tm


# ------------------------------ launchers ----------------------------------- #
def _run_gemm(x, w_cat, out_dtype):
    """x: (B, K), w_cat: (K, N) -> (B, N) lane-dense slab."""
    B, K = x.shape
    N = w_cat.shape[1]
    in_item = jnp.dtype(x.dtype).itemsize
    out_item = jnp.dtype(out_dtype).itemsize
    align = max(_sublane_align(in_item), _sublane_align(out_item))
    limit = _vmem_limit_bytes()
    budget = int(limit * _TILE_BUDGET_FRACTION)

    tm, tn = _gemm_tiles(B, K, N, in_item, out_item, budget, align)
    grid_n = _cdiv(N, tn)
    tm = _ensure_two_blocks(tm, B, grid_n, align)
    grid_m = _cdiv(B, tm)

    # Stream the larger operand from HBM exactly once: its block index goes on
    # the SLOW grid axis; the smaller operand is the one that gets re-fetched.
    w_major = (K * N) >= (B * K)
    if w_major:
        grid = (grid_n, grid_m)
        x_map = lambda j, i: (i, 0)
        w_map = lambda j, i: (0, j)
        o_map = lambda j, i: (i, j)
    else:
        grid = (grid_m, grid_n)
        x_map = lambda i, j: (i, 0)
        w_map = lambda i, j: (0, j)
        o_map = lambda i, j: (i, j)

    cost = pl.CostEstimate(
        flops=2 * B * K * N,
        transcendentals=0,
        bytes_accessed=in_item * (B * K + K * N) + out_item * B * N)

    return pl.pallas_call(
        _gemm_kernel,
        out_shape=jax.ShapeDtypeStruct((B, N), out_dtype),
        grid=grid,
        in_specs=[
            pl.BlockSpec((tm, K), x_map),
            pl.BlockSpec((K, tn), w_map),
        ],
        out_specs=pl.BlockSpec((tm, tn), o_map),
        compiler_params=pltpu.CompilerParams(
            dimension_semantics=("parallel", "parallel"),
            vmem_limit_bytes=limit),
        cost_estimate=cost,
    )(x, w_cat)


def _run_scale(x, s_eff, out_dtype):
    """x: (B, D), s_eff: (A, D) -> (B, A, D).  Fallback for large D where the
    diag-packed GEMM would inflate the weight stream ~D x."""
    B, D = x.shape
    A = s_eff.shape[0]
    in_item = jnp.dtype(x.dtype).itemsize
    out_item = jnp.dtype(out_dtype).itemsize
    align = max(_sublane_align(in_item), _sublane_align(out_item))
    limit = _vmem_limit_bytes()
    budget = int(limit * _TILE_BUDGET_FRACTION)

    tm = _scale_tiles(B, A, D, in_item, out_item, budget, align)
    tm = _ensure_two_blocks(tm, B, 1, align)
    grid = (_cdiv(B, tm),)

    cost = pl.CostEstimate(
        flops=B * A * D,
        transcendentals=0,
        bytes_accessed=in_item * (B * D + A * D) + out_item * B * A * D)

    return pl.pallas_call(
        _scale_kernel,
        out_shape=jax.ShapeDtypeStruct((B, A, D), out_dtype),
        grid=grid,
        in_specs=[
            pl.BlockSpec((tm, D), lambda i: (i, 0)),     # dense 2-D x block
            pl.BlockSpec((A, D), lambda i: (0, 0)),      # scales: fetched once
        ],
        out_specs=pl.BlockSpec((tm, A, D), lambda i: (i, 0, 0)),
        compiler_params=pltpu.CompilerParams(
            dimension_semantics=("parallel",),
            vmem_limit_bytes=limit),
        cost_estimate=cost,
    )(x, s_eff)


# --------------------------- parameter packing ------------------------------ #
def pack_crowds_params(conn_type, params, output_dim, *, dtype=jnp.float32):
    """Fold the torch-module mapping into streaming-ready tensors.

    Hoist this out of the per-call path when params are static: the
    (A,D,D)->(D,A*D) repack and the W+diag(b) fold are pure weight plumbing.
    Returns ('gemm', w_cat, A, D) or ('scale', s_eff, A, D).
    """
    D = output_dim
    eye = jnp.eye(D, dtype=jnp.float32)

    if conn_type in ('MW', 'MW+B'):
        if conn_type == 'MW':
            w = jnp.asarray(params, jnp.float32)                    # (A, D, D)
        else:
            w0, b = params
            w0 = jnp.asarray(w0, jnp.float32)
            b = jnp.asarray(b, jnp.float32)
            # torch quirk: res += x * kernel[1][a] -- the "bias" MULTIPLIES x.
            # Fold it into the matrix:  x@W + x*b == x @ (W + diag(b)).
            # DO NOT "fix" this -- it intentionally mirrors the PyTorch module.
            w = w0 + eye[None, :, :] * b[:, None, :]
        A = w.shape[0]
        w_cat = jnp.transpose(w, (1, 0, 2)).reshape(D, A * D).astype(dtype)
        return ('gemm', w_cat, A, D)

    if conn_type == 'VW':
        s_eff = jnp.asarray(params, jnp.float32)                    # (A, D)
    elif conn_type == 'VW+B':
        s, b = params
        s_eff = jnp.asarray(s, jnp.float32) + jnp.asarray(b, jnp.float32)
    elif conn_type == 'SW':
        s = jnp.asarray(params, jnp.float32)                        # (A, 1)
        s_eff = jnp.broadcast_to(s, (s.shape[0], D))
    else:
        raise Exception('Unknown connection type for CrowdsClassification layer!')

    A = s_eff.shape[0]
    if D <= _SCALE_GEMM_MAX_D:
        # Lane-dense route: diag-pack per-class scales into a (D, A*D) GEMM
        # weight so the output is a dense (B, A*D) slab (no masked stores on
        # the dominant write stream when D < 128).
        w = eye[None, :, :] * s_eff[:, None, :]                     # (A, D, D)
        w_cat = jnp.transpose(w, (1, 0, 2)).reshape(D, A * D).astype(dtype)
        return ('gemm', w_cat, A, D)
    # Large class count: elementwise slab (last dim already lane-dense enough).
    return ('scale', s_eff.astype(dtype), A, D)


# ------------------------------- forward ------------------------------------ #
def crowds_forward_packed(x, packed, *, out_dtype=jnp.float32):
    mode, tbl, A, D = packed
    x = jnp.asarray(x, tbl.dtype)          # match streaming dtype
    B = x.shape[0]
    if mode == 'gemm':
        out = _run_gemm(x, tbl, out_dtype)             # (B, A*D) lane-dense
        return out.reshape(B, A, D)                    # free metadata reshape
    return _run_scale(x, tbl, out_dtype)               # (B, A, D)


def crowds_classification_forward(x, conn_type, params, *,
                                  dtype=jnp.float32, out_dtype=jnp.float32):
    """One-shot convenience wrapper (packs weights every call).  For static
    params, call pack_crowds_params once and reuse crowds_forward_packed."""
    D = x.shape[-1]
    packed = pack_crowds_params(conn_type, params, D, dtype=dtype)
    return crowds_forward_packed(x, packed, out_dtype=out_dtype)


# ------------------------- parameter initialization ------------------------- #
def init_params(key, conn_type, num_annotators, output_dim):
    """Module-style init (identities / ones / zeros) plus a small deterministic
    perturbation so the numerical check is non-trivial."""
    A, D = num_annotators, output_dim
    k0, k1 = jax.random.split(key)
    if conn_type == 'MW':
        eye = jnp.tile(jnp.eye(D, dtype=jnp.float32)[None], (A, 1, 1))
        return eye + 0.01 * jax.random.normal(k0, (A, D, D), jnp.float32)
    if conn_type == 'VW':
        return jnp.ones((A, D), jnp.float32) + 0.01 * jax.random.normal(k0, (A, D))
    if conn_type == 'MW+B':
        eye = jnp.tile(jnp.eye(D, dtype=jnp.float32)[None], (A, 1, 1))
        w = eye + 0.01 * jax.random.normal(k0, (A, D, D), jnp.float32)
        b = jnp.zeros((A, D), jnp.float32) + 0.01 * jax.random.normal(k1, (A, D))
        return (w, b)
    if conn_type == 'VW+B':
        s = jnp.ones((A, D), jnp.float32) + 0.01 * jax.random.normal(k0, (A, D))
        b = jnp.zeros((A, D), jnp.float32) + 0.01 * jax.random.normal(k1, (A, D))
        return (s, b)
    if conn_type == 'SW':
        return jnp.ones((A, 1), jnp.float32) + 0.01 * jax.random.normal(k0, (A, 1))
    raise Exception('Unknown connection type for CrowdsClassification layer!')


# ------------------------------ reference ------------------------------------ #
def reference_forward(x, conn_type, params):
    if conn_type == 'MW':
        return jnp.einsum('bd,ade->bae', x, params)
    if conn_type == 'VW':
        return x[:, None, :] * params[None, :, :]
    if conn_type == 'MW+B':
        w, b = params
        return jnp.einsum('bd,ade->bae', x, w) + x[:, None, :] * b[None, :, :]
    if conn_type == 'VW+B':
        s, b = params
        return x[:, None, :] * s[None] + x[:, None, :] * b[None]
    if conn_type == 'SW':
        return x[:, None, :] * params[None, :, :]    # (A,1) broadcasts over D
    raise Exception('Unknown connection type for CrowdsClassification layer!')


# --------------------------------- main -------------------------------------- #
if __name__ == "__main__":
    key = jax.random.PRNGKey(0)
    kx, kp = jax.random.split(key)

    # Small shapes implied by the module: x is (batch, output_dim).
    batch, output_dim, num_annotators = 8, 4, 5
    x = jax.random.normal(kx, (batch, output_dim), jnp.float32)

    for conn_type in ['MW', 'VW', 'MW+B', 'VW+B', 'SW']:
        params = init_params(kp, conn_type, num_annotators, output_dim)
        out = jax.block_until_ready(
            crowds_classification_forward(x, conn_type, params))
        ref = reference_forward(x, conn_type, params)
        assert out.shape == (batch, num_annotators, output_dim), (conn_type, out.shape)
        assert jnp.allclose(out, ref, atol=1e-5, rtol=1e-5), conn_type

    # Hoisted packing (static params): pack once, call many times.
    params_mw = init_params(kp, 'MW', num_annotators, output_dim)
    packed = pack_crowds_params('MW', params_mw, output_dim)
    out2 = jax.block_until_ready(crowds_forward_packed(x, packed))
    assert jnp.allclose(out2, reference_forward(x, 'MW', params_mw),
                        atol=1e-5, rtol=1e-5)

    # bf16 weight/activation streams (halves the dominant HBM traffic;
    # MXU still accumulates in f32).  Looser tolerance is deliberate.
    out_bf16 = jax.block_until_ready(
        crowds_classification_forward(x, 'MW', params_mw, dtype=jnp.bfloat16))
    assert jnp.allclose(out_bf16, reference_forward(x, 'MW', params_mw),
                        atol=5e-2, rtol=5e-2)

    # Large class count exercises the elementwise fallback path (D > 128).
    D_big, A_big = 160, 3
    x_big = jax.random.normal(kx, (batch, D_big), jnp.float32)
    s_big = init_params(kp, 'VW', A_big, D_big)
    out_big = jax.block_until_ready(
        crowds_classification_forward(x_big, 'VW', s_big))
    assert out_big.shape == (batch, A_big, D_big)
    assert jnp.allclose(out_big, reference_forward(x_big, 'VW', s_big),
                        atol=1e-5, rtol=1e-5)

    print("KERNEL_OK")
</pallas_src>

<mosaic_0001>
module attributes {stable_mosaic.version = 11 : i64} {
  func.func @_gemm_kernel(%arg0: i32, %arg1: i32, %arg2: memref<8x4xf32, #tpu.memory_space<vmem>>, %arg3: memref<4x20xf32, #tpu.memory_space<vmem>>, %arg4: memref<8x20xf32, #tpu.memory_space<vmem>>) attributes {dimension_semantics = [#tpu.dimension_semantics<parallel>, #tpu.dimension_semantics<parallel>], iteration_bounds = array<i64: 1, 1>, scalar_prefetch = 0 : i64, scratch_operands = 0 : i64, tpu.core_type = #tpu.core_type<tc>, window_params = [{transform_indices = @transform_0, window_bounds = array<i64: 8, 4>}, {transform_indices = @transform_1, window_bounds = array<i64: 4, 20>}, {transform_indices = @transform_2, window_bounds = array<i64: 8, 20>}]} {
    %c0 = arith.constant 0 : index
    %c0_0 = arith.constant 0 : index
    %0 = vector.load %arg2[%c0, %c0_0] : memref<8x4xf32, #tpu.memory_space<vmem>>, vector<8x4xf32>
    %c0_1 = arith.constant 0 : index
    %c0_2 = arith.constant 0 : index
    %1 = vector.load %arg3[%c0_1, %c0_2] : memref<4x20xf32, #tpu.memory_space<vmem>>, vector<4x20xf32>
    %cst = arith.constant dense<0.000000e+00> : vector<8x20xf32>
    %2 = tpu.matmul %0, %1, %cst {dimension_numbers = #tpu.dot_dimension_numbers<[1], [0], [0], [1], [0, 0, 1, 1], [], []>} : vector<8x4xf32>, vector<4x20xf32>, vector<8x20xf32> -> vector<8x20xf32>
    %c0_3 = arith.constant 0 : index
    %c0_4 = arith.constant 0 : index
    %3 = vector.load %arg4[%c0_3, %c0_4] : memref<8x20xf32, #tpu.memory_space<vmem>>, vector<8x20xf32>
    tpu.vector_store %arg4[%c0_3, %c0_4], %2 {strides = array<i32>} : memref<8x20xf32, #tpu.memory_space<vmem>>, vector<8x20xf32>,
    return
  }
  func.func @transform_0(%arg0: i32, %arg1: i32) -> (i32, i32) {
    %c0_i32 = arith.constant 0 : i32
    %c0_i32_0 = arith.constant 0 : i32
    return %arg1, %c0_i32 : i32, i32
  }
  func.func @transform_1(%arg0: i32, %arg1: i32) -> (i32, i32) {
    %c0_i32 = arith.constant 0 : i32
    %c0_i32_0 = arith.constant 0 : i32
    return %c0_i32, %arg0 : i32, i32
  }
  func.func @transform_2(%arg0: i32, %arg1: i32) -> (i32, i32) {
    %c0_i32 = arith.constant 0 : i32
    return %arg1, %arg0 : i32, i32
  }
}

</mosaic_0001>

<llo_original>
// kernel: tpu_custom_call.1
$region0: #{tpu_custom_call.1}
  #allocation0 [shape = 'u32[]', space=smem, size = 0x4, offset = 0x4, fixed_abs, tag = 'smem constant byte address 0x4 - core index']
  #allocation1 [shape = 'u32[144,128]{1,0:T(1,128)}', space=vmem, size = 0x12000, scoped, tag = 'internal scratch']
  %s0 = inlined_call_operand.vmem [shape: f32[8,4], index: 0, kind: input, shape index: {}]
  %s1 = inlined_call_operand.vmem [shape: f32[4,20], index: 1, kind: input, shape index: {}]
  %s2 = inlined_call_operand.hbm [shape: f32[8,20], index: 2, kind: output, shape index: {}]
  %s3 = sld [smem:[#allocation0]]
  $region18: #{tpu_custom_call.1} parent=0
    _
  %s5 = ssub.s32 1, %s3
  %s6 = scalar_select 0, %s5, %s3
  $region1: #{tpu_custom_call.1} parent=0
    #allocation2 [shape = 'u8[4096]{0}', space=vmem, size = 0x1000, scoped, tag = 'output window, operand 0, single buffered']
    #allocation3 [shape = 's32[1]{0}', space=sflag, size = 0x4, scoped, tag = 'scoped memory for tpu_custom_call.1']
    %7 = vsyncpa [#allocation3], 0
    // Predicated region
    $region2: #{tpu_custom_call.1} parent=1 // pred_check
      _
    $region3: #{tpu_custom_call.1} parent=1 // pred_check_branch
      %9 = sbr.rel (0) target = $region5
    $region4: #{tpu_custom_call.1} parent=1 // pred_region
      _
    $region5: #{tpu_custom_call.1} parent=1 // pred_fallthru
      _
    // Predicated region
    $region6: #{tpu_custom_call.1} parent=1 // pred_check
      _
    $region7: #{tpu_custom_call.1} parent=1 // pred_check_branch
      %11 = sbr.rel (0) target = $region9
    $region8: #{tpu_custom_call.1} parent=1 // pred_region
      _
    $region9: #{tpu_custom_call.1} parent=1 // pred_fallthru
      _
    %v12 = vld [vmem:[%s0] sm:$0xff]
    %v13 = vld [vmem:[%s1] sm:$0xf]
    %vm14 = vcmask 31744
    %v16 = vsel %vm14, %v12, 0
    %vm18 = vcmask 1043456
    %v20 = vsel %vm18, %v13, 0
    %22 = vmatprep.subr.mxu0 0.0
    %23 = vmatpush1.msra.mxu0 %v20
    %24 = vmatprep.subr.mxu0 0.0
    %25 = vmatpush1.msra.mxu0 0.0
    %26 = vmatprep.subr.mxu0 0.0
    %27 = vmatpush1.msra.mxu0 0.0
    %28 = vmatprep.subr.mxu0 0.0
    %29 = vmatpush1.msra.mxu0 0.0
    %30 = vmatprep.subr.mxu0 0.0
    %31 = vmatpush1.msra.mxu0 0.0
    %32 = vmatprep.subr.mxu0 0.0
    %33 = vmatpush1.msra.mxu0 0.0
    %34 = vmatprep.subr.mxu0 0.0
    %35 = vmatpush1.msra.mxu0 0.0
    %36 = vmatprep.subr.mxu0 0.0
    %37 = vmatpush1.msra.mxu0 0.0
    %38 = vmatprep.subr.mxu0 0.0
    %39 = vmatpush1.msra.mxu0 0.0
    %40 = vmatprep.subr.mxu0 0.0
    %41 = vmatpush1.msra.mxu0 0.0
    %42 = vmatprep.subr.mxu0 0.0
    %43 = vmatpush1.msra.mxu0 0.0
    %44 = vmatprep.subr.mxu0 0.0
    %45 = vmatpush1.msra.mxu0 0.0
    %46 = vmatprep.subr.mxu0 0.0
    %47 = vmatpush1.msra.mxu0 0.0
    %48 = vmatprep.subr.mxu0 0.0
    %49 = vmatpush1.msra.mxu0 0.0
    %50 = vmatprep.subr.mxu0 0.0
    %51 = vmatpush1.msra.mxu0 0.0
    %52 = vmatprep.subr.mxu0 0.0
    %53 = vmatpush1.msra.mxu0 0.0
    %54 = vmatprep.subr.mxu0 0.0
    %55 = vmatpush1.msra.mxu0 0.0
    %56 = vmatprep.subr.mxu0 0.0
    %57 = vmatpush1.msra.mxu0 0.0
    %58 = vmatprep.subr.mxu0 0.0
    %59 = vmatpush1.msra.mxu0 0.0
    %60 = vmatprep.subr.mxu0 0.0
    %61 = vmatpush1.msra.mxu0 0.0
    %62 = vmatprep.subr.mxu0 0.0
    %63 = vmatpush1.msra.mxu0 0.0
    %64 = vmatprep.subr.mxu0 0.0
    %65 = vmatpush1.msra.mxu0 0.0
    %66 = vmatprep.subr.mxu0 0.0
    %67 = vmatpush1.msra.mxu0 0.0
    %68 = vmatprep.subr.mxu0 0.0
    %69 = vmatpush1.msra.mxu0 0.0
    %70 = vmatprep.subr.mxu0 0.0
    %71 = vmatpush1.msra.mxu0 0.0
    %72 = vmatprep.subr.mxu0 0.0
    %73 = vmatpush1.msra.mxu0 0.0
    %74 = vmatprep.subr.mxu0 0.0
    %75 = vmatpush1.msra.mxu0 0.0
    %76 = vmatprep.subr.mxu0 0.0
    %77 = vmatpush1.msra.mxu0 0.0
    %78 = vmatprep.subr.mxu0 0.0
    %79 = vmatpush1.msra.mxu0 0.0
    %80 = vmatprep.subr.mxu0 0.0
    %81 = vmatpush1.msra.mxu0 0.0
    %82 = vmatprep.subr.mxu0 0.0
    %83 = vmatpush1.msra.mxu0 0.0
    %84 = vmatprep.subr.mxu0 0.0
    %85 = vmatpush1.msra.mxu0 0.0
    %86 = vmatprep.mubr.f32.mxu0 0.0
    %87 = vmatmul.mubr.f32.gmra.mrb[0].mxu0 %v16
    %v88 = vpop.f32.mrb[0].mxu0
    %v89 = vadd.f32 0.0, %v88
    %v90 = vpop.f32.mrb[0].mxu0
    %91 = vdwg.mxu0
    %vm92 = vcmask 162816
    %93 = vst.msk [vmem:[#allocation2] sm:$0xff] %vm92, %v89
    // Predicated region
    $region10: #{tpu_custom_call.1} parent=1 // pred_check
      _
    $region11: #{tpu_custom_call.1} parent=1 // pred_check_branch
      %95 = sbr.rel (0) target = $region13
    $region12: #{tpu_custom_call.1} parent=1 // pred_region
      %s97 = ssub.s32 128, 128
      %98 = vsyncadd [#allocation3], %s97
      %s100 = sshll.u32 [#allocation2], 4
      %s101 = int_to_ptr.vmem [resolvable:$true] %s100
      %103 = dma.vmem_to_hbm [thread:$0]  %s101, 128, %s2, [#allocation3]
    $region13: #{tpu_custom_call.1} parent=1 // pred_fallthru
      _
    // Predicated region
    $region14: #{tpu_custom_call.1} parent=1 // pred_check
      _
    $region15: #{tpu_custom_call.1} parent=1 // pred_check_branch
      %105 = sbr.rel (0) target = $region17
    $region16: #{tpu_custom_call.1} parent=1 // pred_region
      %106 = dma.done [#allocation3], 128
    $region17: #{tpu_custom_call.1} parent=1 // pred_fallthru
      _
    %107 = vsyncpa [#allocation3], 1

</llo_original>
